<compile_context>
chip_gen: v6e
topology: v6e:2x2x1
jax: 0.10.0
libtpu: 0.0.40
codegen_flags: <defaults>
</compile_context>

<pallas_src>
import functools

import jax
import jax.numpy as jnp
from jax.experimental import pallas as pl
from jax.experimental.pallas import tpu as pltpu


MM_DTYPE = jnp.bfloat16   # matmul operand dtype (fast MXU path, halves HBM traffic)
BN_EPS = 1e-5             # nn.BatchNorm1d default
LEAKY_SLOPE = 0.01        # nn.LeakyReLU default negative_slope


def _round_up(x, m):
    return (x + m - 1) // m * m


# --------- pass 1: folded encoder matmul + per-tile BatchNorm statistics -----

def _encoder_kernel(x_ref, w_ref, b_ref, h_ref, sum_ref, ssq_ref,
                    *, tile_n, n_valid, masked):
    # (TILE_N, L_pad) @ (L_pad, P_pad) on the MXU, f32 accumulation.
    h = jnp.dot(x_ref[...], w_ref[...], preferred_element_type=jnp.float32)
    h = h + b_ref[...]                       # bias in f32
    h_ref[...] = h

    # Per-tile partial sums for the *global* batch statistics; rows >= n_valid
    # are zero-padding rows and must not contribute.
    if masked:
        row = (jax.lax.broadcasted_iota(jnp.int32, h.shape, 0)
               + pl.program_id(0) * tile_n)
        hm = jnp.where(row < n_valid, h, 0.0)
    else:
        hm = h

    s = jnp.sum(hm, axis=0, keepdims=True)            # (1, P_pad)
    ss = jnp.sum(hm * hm, axis=0, keepdims=True)      # (1, P_pad)
    # Each grid step owns its own (1, 8, P_pad) block -> safe with "parallel".
    sum_ref[...] = jnp.broadcast_to(s[None], sum_ref.shape)
    ssq_ref[...] = jnp.broadcast_to(ss[None], ssq_ref.shape)


# --------- pass 2: BN affine + LeakyReLU + ASC + decoder matmul --------------

def _head_kernel(h_ref, scale_ref, shift_ref, wd_ref, abu_ref, rec_ref):
    # BatchNorm folded into a per-feature affine (scale/shift computed from the
    # global batch statistics in the wrapper).
    h = h_ref[...] * scale_ref[...] + shift_ref[...]
    # LeakyReLU(0.01)
    h = jnp.where(h >= 0.0, h, LEAKY_SLOPE * h)
    # ASC: abundances sum-to-one along the feature axis (EUP reciprocal).
    denom = jnp.sum(h, axis=1, keepdims=True)
    abu = h * pl.reciprocal(denom, approx=True)
    abu_ref[...] = abu.astype(abu_ref.dtype)
    # Decoder: Linear(P, L, bias=False) on the MXU.
    rec = jnp.dot(abu.astype(wd_ref.dtype), wd_ref[...],
                  preferred_element_type=jnp.float32)
    rec_ref[...] = rec.astype(rec_ref.dtype)


# ------------------------------- wrapper -------------------------------------

@jax.jit
def daen_forward(x, params):
    """x: (N, L) float32.  params: dict of pre-transposed (in, out) weights."""
    N, L = x.shape
    P = params["w4"].shape[1]

    # ---- fold the four activation-free encoder Linears (done in f32) ----
    w_eff = params["w1"] @ params["w2"] @ params["w3"] @ params["w4"]       # (L, P)
    b_eff = ((params["b1"] @ params["w2"] + params["b2"]) @ params["w3"]
             + params["b3"]) @ params["w4"] + params["b4"]                  # (1, P)

    # ---- lane-dense padded shapes / batch tiling ----
    L_pad = _round_up(L, 128)
    P_pad = _round_up(P, 128)
    tile_n = min(512, _round_up(N, 16))        # multiple of 16 (bf16 sublanes)
    n_pad = _round_up(N, tile_n)
    n_tiles = n_pad // tile_n

    x_p = jnp.zeros((n_pad, L_pad), MM_DTYPE).at[:N, :L].set(x.astype(MM_DTYPE))
    w_p = jnp.zeros((L_pad, P_pad), MM_DTYPE).at[:L, :P].set(w_eff.astype(MM_DTYPE))
    b_p = jnp.zeros((1, P_pad), jnp.float32).at[:, :P].set(b_eff)
    wd_p = jnp.zeros((P_pad, L_pad), MM_DTYPE).at[:P, :L].set(
        params["wd"].astype(MM_DTYPE))
    gamma_p = jnp.zeros((1, P_pad), jnp.float32).at[:, :P].set(params["gamma"])
    beta_p = jnp.zeros((1, P_pad), jnp.float32).at[:, :P].set(params["beta"])

    # ---- pass 1: encoder matmul + per-tile stats ----
    enc_cost = pl.CostEstimate(
        flops=2 * n_pad * L_pad * P_pad + 4 * n_pad * P_pad,
        transcendentals=0,
        bytes_accessed=(x_p.size * 2 + w_p.size * 2 + b_p.size * 4
                        + n_pad * P_pad * 4 + 2 * n_tiles * 8 * P_pad * 4),
    )
    h_pre, tile_sum, tile_ssq = pl.pallas_call(
        functools.partial(_encoder_kernel, tile_n=tile_n, n_valid=N,
                          masked=(n_pad != N)),
        grid=(n_tiles,),
        in_specs=[
            pl.BlockSpec((tile_n, L_pad), lambda i: (i, 0)),
            pl.BlockSpec((L_pad, P_pad), lambda i: (0, 0)),
            pl.BlockSpec((1, P_pad), lambda i: (0, 0)),
        ],
        out_specs=(
            pl.BlockSpec((tile_n, P_pad), lambda i: (i, 0)),
            pl.BlockSpec((1, 8, P_pad), lambda i: (i, 0, 0)),
            pl.BlockSpec((1, 8, P_pad), lambda i: (i, 0, 0)),
        ),
        out_shape=(
            jax.ShapeDtypeStruct((n_pad, P_pad), jnp.float32),
            jax.ShapeDtypeStruct((n_tiles, 8, P_pad), jnp.float32),
            jax.ShapeDtypeStruct((n_tiles, 8, P_pad), jnp.float32),
        ),
        compiler_params=pltpu.CompilerParams(dimension_semantics=("parallel",)),
        cost_estimate=enc_cost,
    )(x_p, w_p, b_p)

    # ---- global BatchNorm1d statistics (training mode, biased variance) ----
    s = jnp.sum(tile_sum[:, 0, :], axis=0, keepdims=True)      # (1, P_pad)
    ss = jnp.sum(tile_ssq[:, 0, :], axis=0, keepdims=True)     # (1, P_pad)
    mean = s / N
    var = jnp.maximum(ss / N - mean * mean, 0.0)
    inv = jax.lax.rsqrt(var + BN_EPS)
    scale = gamma_p * inv                                       # (1, P_pad)
    shift = beta_p - mean * scale                               # (1, P_pad)

    # ---- pass 2: BN affine + LeakyReLU + ASC + decoder ----
    head_cost = pl.CostEstimate(
        flops=2 * n_pad * P_pad * L_pad + 6 * n_pad * P_pad,
        transcendentals=n_pad,
        bytes_accessed=(n_pad * P_pad * 4 + 2 * P_pad * 4 + wd_p.size * 2
                        + n_pad * P_pad * 4 + n_pad * L_pad * 4),
    )
    abu_p, rec_p = pl.pallas_call(
        _head_kernel,
        grid=(n_tiles,),
        in_specs=[
            pl.BlockSpec((tile_n, P_pad), lambda i: (i, 0)),
            pl.BlockSpec((1, P_pad), lambda i: (0, 0)),
            pl.BlockSpec((1, P_pad), lambda i: (0, 0)),
            pl.BlockSpec((P_pad, L_pad), lambda i: (0, 0)),
        ],
        out_specs=(
            pl.BlockSpec((tile_n, P_pad), lambda i: (i, 0)),
            pl.BlockSpec((tile_n, L_pad), lambda i: (i, 0)),
        ),
        out_shape=(
            jax.ShapeDtypeStruct((n_pad, P_pad), jnp.float32),
            jax.ShapeDtypeStruct((n_pad, L_pad), jnp.float32),
        ),
        compiler_params=pltpu.CompilerParams(dimension_semantics=("parallel",)),
        cost_estimate=head_cost,
    )(h_pre, scale, shift, wd_p)

    return abu_p[:N, :P], rec_p[:N, :L]


def init_params(key, L, P):
    """Deterministic init mimicking nn.Linear defaults (uniform +/- 1/sqrt(fan_in)).
    Linear weights are stored transposed: (in_features, out_features)."""
    dims = [(L, 9 * P), (9 * P, 6 * P), (6 * P, 3 * P), (3 * P, P)]
    params = {}
    keys = jax.random.split(key, 2 * len(dims) + 1)
    for i, (fi, fo) in enumerate(dims):
        bound = 1.0 / (fi ** 0.5)
        params[f"w{i+1}"] = jax.random.uniform(keys[2 * i], (fi, fo),
                                               jnp.float32, -bound, bound)
        params[f"b{i+1}"] = jax.random.uniform(keys[2 * i + 1], (1, fo),
                                               jnp.float32, -bound, bound)
    # BatchNorm1d affine params (PyTorch defaults: weight=1, bias=0)
    params["gamma"] = jnp.ones((1, P), jnp.float32)
    params["beta"] = jnp.zeros((1, P), jnp.float32)
    # Decoder Linear(P, L, bias=False), stored as (P, L)
    bound = 1.0 / (P ** 0.5)
    params["wd"] = jax.random.uniform(keys[-1], (P, L), jnp.float32, -bound, bound)
    return params


if __name__ == "__main__":
    N, L, P = 16, 32, 4   # batch of pixels, num_bands, num_endmembers
    key = jax.random.PRNGKey(0)
    kx, kp = jax.random.split(key)

    # Hyperspectral reflectances are non-negative; keep inputs positive.
    x = jax.random.uniform(kx, (N, L), jnp.float32, 0.0, 1.0)
    params = init_params(kp, L, P)

    abu_est, re_result = daen_forward(x, params)
    jax.block_until_ready((abu_est, re_result))

    assert abu_est.shape == (N, P)
    assert re_result.shape == (N, L)
    assert bool(jnp.isfinite(abu_est).all())
    assert bool(jnp.isfinite(re_result).all())
    print("KERNEL_OK")
</pallas_src>

<mosaic_0001>
module attributes {stable_mosaic.version = 11 : i64} {
  func.func @_encoder_kernel(%arg0: i32, %arg1: memref<16x128xbf16, #tpu.memory_space<vmem>>, %arg2: memref<128x128xbf16, #tpu.memory_space<vmem>>, %arg3: memref<1x128xf32, #tpu.memory_space<vmem>>, %arg4: memref<16x128xf32, #tpu.memory_space<vmem>>, %arg5: memref<1x8x128xf32, #tpu.memory_space<vmem>>, %arg6: memref<1x8x128xf32, #tpu.memory_space<vmem>>) attributes {dimension_semantics = [#tpu.dimension_semantics<parallel>], iteration_bounds = array<i64: 1>, scalar_prefetch = 0 : i64, scratch_operands = 0 : i64, tpu.core_type = #tpu.core_type<tc>, window_params = [{transform_indices = @transform_0, window_bounds = array<i64: 16, 128>}, {pipeline_mode = #tpu.pipeline_mode<synchronous>, transform_indices = @transform_1, window_bounds = array<i64: 128, 128>}, {pipeline_mode = #tpu.pipeline_mode<synchronous>, transform_indices = @transform_2, window_bounds = array<i64: 1, 128>}, {transform_indices = @transform_3, window_bounds = array<i64: 16, 128>}, {transform_indices = @transform_4, window_bounds = array<i64: 1, 8, 128>}, {transform_indices = @transform_5, window_bounds = array<i64: 1, 8, 128>}]} {
    %c0 = arith.constant 0 : index
    %c0_0 = arith.constant 0 : index
    %0 = vector.load %arg1[%c0, %c0_0] : memref<16x128xbf16, #tpu.memory_space<vmem>>, vector<16x128xbf16>
    %c0_1 = arith.constant 0 : index
    %c0_2 = arith.constant 0 : index
    %1 = vector.load %arg2[%c0_1, %c0_2] : memref<128x128xbf16, #tpu.memory_space<vmem>>, vector<128x128xbf16>
    %cst = arith.constant dense<0.000000e+00> : vector<16x128xf32>
    %2 = tpu.matmul %0, %1, %cst {dimension_numbers = #tpu.dot_dimension_numbers<[1], [0], [0], [1], [0, 0, 1, 1], [], []>} : vector<16x128xbf16>, vector<128x128xbf16>, vector<16x128xf32> -> vector<16x128xf32>
    %c0_3 = arith.constant 0 : index
    %c0_4 = arith.constant 0 : index
    %3 = vector.load %arg3[%c0_3, %c0_4] : memref<1x128xf32, #tpu.memory_space<vmem>>, vector<1x128xf32>
    %4 = vector.broadcast %3 : vector<1x128xf32> to vector<16x128xf32>
    %5 = arith.addf %2, %4 : vector<16x128xf32>
    %c0_5 = arith.constant 0 : index
    %c0_6 = arith.constant 0 : index
    %6 = vector.load %arg4[%c0_5, %c0_6] : memref<16x128xf32, #tpu.memory_space<vmem>>, vector<16x128xf32>
    tpu.vector_store %arg4[%c0_5, %c0_6], %5 {strides = array<i32>} : memref<16x128xf32, #tpu.memory_space<vmem>>, vector<16x128xf32>,
    %cst_7 = arith.constant dense<0.000000e+00> : vector<128xf32>
    %7 = vector.multi_reduction <add>, %5, %cst_7 [0] : vector<16x128xf32> to vector<128xf32>
    %8 = vector.shape_cast %7 : vector<128xf32> to vector<1x128xf32>
    %9 = arith.mulf %5, %5 : vector<16x128xf32>
    %cst_8 = arith.constant dense<0.000000e+00> : vector<128xf32>
    %10 = vector.multi_reduction <add>, %9, %cst_8 [0] : vector<16x128xf32> to vector<128xf32>
    %11 = vector.shape_cast %10 : vector<128xf32> to vector<1x128xf32>
    %12 = vector.shape_cast %8 : vector<1x128xf32> to vector<1x1x128xf32>
    %13 = vector.shape_cast %12 : vector<1x1x128xf32> to vector<1x1x128xf32>
    %14 = vector.broadcast %13 : vector<1x1x128xf32> to vector<1x8x128xf32>
    %c0_9 = arith.constant 0 : index
    %c0_10 = arith.constant 0 : index
    %c0_11 = arith.constant 0 : index
    %15 = vector.load %arg5[%c0_9, %c0_10, %c0_11] : memref<1x8x128xf32, #tpu.memory_space<vmem>>, vector<1x8x128xf32>
    tpu.vector_store %arg5[%c0_9, %c0_10, %c0_11], %14 {strides = array<i32>} : memref<1x8x128xf32, #tpu.memory_space<vmem>>, vector<1x8x128xf32>,
    %16 = vector.shape_cast %11 : vector<1x128xf32> to vector<1x1x128xf32>
    %17 = vector.shape_cast %16 : vector<1x1x128xf32> to vector<1x1x128xf32>
    %18 = vector.broadcast %17 : vector<1x1x128xf32> to vector<1x8x128xf32>
    %c0_12 = arith.constant 0 : index
    %c0_13 = arith.constant 0 : index
    %c0_14 = arith.constant 0 : index
    %19 = vector.load %arg6[%c0_12, %c0_13, %c0_14] : memref<1x8x128xf32, #tpu.memory_space<vmem>>, vector<1x8x128xf32>
    tpu.vector_store %arg6[%c0_12, %c0_13, %c0_14], %18 {strides = array<i32>} : memref<1x8x128xf32, #tpu.memory_space<vmem>>, vector<1x8x128xf32>,
    return
  }
  func.func @transform_0(%arg0: i32) -> (i32, i32) {
    %c0_i32 = arith.constant 0 : i32
    %c0_i32_0 = arith.constant 0 : i32
    return %arg0, %c0_i32 : i32, i32
  }
  func.func @transform_1(%arg0: i32) -> (i32, i32) {
    %c0_i32 = arith.constant 0 : i32
    %c0_i32_0 = arith.constant 0 : i32
    %c0_i32_1 = arith.constant 0 : i32
    return %c0_i32, %c0_i32_0 : i32, i32
  }
  func.func @transform_2(%arg0: i32) -> (i32, i32) {
    %c0_i32 = arith.constant 0 : i32
    %c0_i32_0 = arith.constant 0 : i32
    %c0_i32_1 = arith.constant 0 : i32
    return %c0_i32, %c0_i32_0 : i32, i32
  }
  func.func @transform_3(%arg0: i32) -> (i32, i32) {
    %c0_i32 = arith.constant 0 : i32
    %c0_i32_0 = arith.constant 0 : i32
    return %arg0, %c0_i32 : i32, i32
  }
  func.func @transform_4(%arg0: i32) -> (i32, i32, i32) {
    %c0_i32 = arith.constant 0 : i32
    %c0_i32_0 = arith.constant 0 : i32
    %c0_i32_1 = arith.constant 0 : i32
    return %arg0, %c0_i32, %c0_i32_0 : i32, i32, i32
  }
  func.func @transform_5(%arg0: i32) -> (i32, i32, i32) {
    %c0_i32 = arith.constant 0 : i32
    %c0_i32_0 = arith.constant 0 : i32
    %c0_i32_1 = arith.constant 0 : i32
    return %arg0, %c0_i32, %c0_i32_0 : i32, i32, i32
  }
}

module attributes {stable_mosaic.version = 11 : i64} {
  func.func @_head_kernel(%arg0: i32, %arg1: memref<16x128xf32, #tpu.memory_space<vmem>>, %arg2: memref<1x128xf32, #tpu.memory_space<vmem>>, %arg3: memref<1x128xf32, #tpu.memory_space<vmem>>, %arg4: memref<128x128xbf16, #tpu.memory_space<vmem>>, %arg5: memref<16x128xf32, #tpu.memory_space<vmem>>, %arg6: memref<16x128xf32, #tpu.memory_space<vmem>>) attributes {dimension_semantics = [#tpu.dimension_semantics<parallel>], iteration_bounds = array<i64: 1>, scalar_prefetch = 0 : i64, scratch_operands = 0 : i64, tpu.core_type = #tpu.core_type<tc>, window_params = [{transform_indices = @transform_0, window_bounds = array<i64: 16, 128>}, {pipeline_mode = #tpu.pipeline_mode<synchronous>, transform_indices = @transform_1, window_bounds = array<i64: 1, 128>}, {pipeline_mode = #tpu.pipeline_mode<synchronous>, transform_indices = @transform_2, window_bounds = array<i64: 1, 128>}, {pipeline_mode = #tpu.pipeline_mode<synchronous>, transform_indices = @transform_3, window_bounds = array<i64: 128, 128>}, {transform_indices = @transform_4, window_bounds = array<i64: 16, 128>}, {transform_indices = @transform_5, window_bounds = array<i64: 16, 128>}]} {
    %c0 = arith.constant 0 : index
    %c0_0 = arith.constant 0 : index
    %0 = vector.load %arg1[%c0, %c0_0] : memref<16x128xf32, #tpu.memory_space<vmem>>, vector<16x128xf32>
    %c0_1 = arith.constant 0 : index
    %c0_2 = arith.constant 0 : index
    %1 = vector.load %arg2[%c0_1, %c0_2] : memref<1x128xf32, #tpu.memory_space<vmem>>, vector<1x128xf32>
    %2 = vector.broadcast %1 : vector<1x128xf32> to vector<16x128xf32>
    %3 = arith.mulf %0, %2 : vector<16x128xf32>
    %c0_3 = arith.constant 0 : index
    %c0_4 = arith.constant 0 : index
    %4 = vector.load %arg3[%c0_3, %c0_4] : memref<1x128xf32, #tpu.memory_space<vmem>>, vector<1x128xf32>
    %5 = vector.broadcast %4 : vector<1x128xf32> to vector<16x128xf32>
    %6 = arith.addf %3, %5 : vector<16x128xf32>
    %cst = arith.constant 0.000000e+00 : f32
    %7 = vector.broadcast %cst : f32 to vector<16x128xf32>
    %8 = arith.cmpf oge, %6, %7 : vector<16x128xf32>
    %cst_5 = arith.constant 0.00999999977 : f32
    %9 = vector.broadcast %cst_5 : f32 to vector<16x128xf32>
    %10 = arith.mulf %9, %6 : vector<16x128xf32>
    %11 = arith.select %8, %6, %10 : vector<16x128xi1>, vector<16x128xf32>
    %cst_6 = arith.constant dense<0.000000e+00> : vector<16xf32>
    %12 = vector.multi_reduction <add>, %11, %cst_6 [1] : vector<16x128xf32> to vector<16xf32>
    %13 = vector.shape_cast %12 : vector<16xf32> to vector<16x1xf32>
    %14 = tpu.reciprocal %13 {approx = true} : vector<16x1xf32> -> vector<16x1xf32>
    %15 = vector.broadcast %14 : vector<16x1xf32> to vector<16x128xf32>
    %16 = arith.mulf %11, %15 : vector<16x128xf32>
    %c0_7 = arith.constant 0 : index
    %c0_8 = arith.constant 0 : index
    %17 = vector.load %arg5[%c0_7, %c0_8] : memref<16x128xf32, #tpu.memory_space<vmem>>, vector<16x128xf32>
    tpu.vector_store %arg5[%c0_7, %c0_8], %16 {strides = array<i32>} : memref<16x128xf32, #tpu.memory_space<vmem>>, vector<16x128xf32>,
    %18 = arith.truncf %16 : vector<16x128xf32> to vector<16x128xbf16>
    %c0_9 = arith.constant 0 : index
    %c0_10 = arith.constant 0 : index
    %19 = vector.load %arg4[%c0_9, %c0_10] : memref<128x128xbf16, #tpu.memory_space<vmem>>, vector<128x128xbf16>
    %cst_11 = arith.constant dense<0.000000e+00> : vector<16x128xf32>
    %20 = tpu.matmul %18, %19, %cst_11 {dimension_numbers = #tpu.dot_dimension_numbers<[1], [0], [0], [1], [0, 0, 1, 1], [], []>} : vector<16x128xbf16>, vector<128x128xbf16>, vector<16x128xf32> -> vector<16x128xf32>
    %c0_12 = arith.constant 0 : index
    %c0_13 = arith.constant 0 : index
    %21 = vector.load %arg6[%c0_12, %c0_13] : memref<16x128xf32, #tpu.memory_space<vmem>>, vector<16x128xf32>
    tpu.vector_store %arg6[%c0_12, %c0_13], %20 {strides = array<i32>} : memref<16x128xf32, #tpu.memory_space<vmem>>, vector<16x128xf32>,
    return
  }
  func.func @transform_0(%arg0: i32) -> (i32, i32) {
    %c0_i32 = arith.constant 0 : i32
    %c0_i32_0 = arith.constant 0 : i32
    return %arg0, %c0_i32 : i32, i32
  }
  func.func @transform_1(%arg0: i32) -> (i32, i32) {
    %c0_i32 = arith.constant 0 : i32
    %c0_i32_0 = arith.constant 0 : i32
    %c0_i32_1 = arith.constant 0 : i32
    return %c0_i32, %c0_i32_0 : i32, i32
  }
  func.func @transform_2(%arg0: i32) -> (i32, i32) {
    %c0_i32 = arith.constant 0 : i32
    %c0_i32_0 = arith.constant 0 : i32
    %c0_i32_1 = arith.constant 0 : i32
    return %c0_i32, %c0_i32_0 : i32, i32
  }
  func.func @transform_3(%arg0: i32) -> (i32, i32) {
    %c0_i32 = arith.constant 0 : i32
    %c0_i32_0 = arith.constant 0 : i32
    %c0_i32_1 = arith.constant 0 : i32
    return %c0_i32, %c0_i32_0 : i32, i32
  }
  func.func @transform_4(%arg0: i32) -> (i32, i32) {
    %c0_i32 = arith.constant 0 : i32
    %c0_i32_0 = arith.constant 0 : i32
    return %arg0, %c0_i32 : i32, i32
  }
  func.func @transform_5(%arg0: i32) -> (i32, i32) {
    %c0_i32 = arith.constant 0 : i32
    %c0_i32_0 = arith.constant 0 : i32
    return %arg0, %c0_i32 : i32, i32
  }
}

</mosaic_0001>

<llo_original>
// kernel: daen_forward.2
$region0: #{daen_forward.2}
  #allocation0 [shape = 'u32[]', space=smem, size = 0x4, offset = 0x4, fixed_abs, tag = 'smem constant byte address 0x4 - core index']
  #allocation1 [shape = 'u32[144,128]{1,0:T(1,128)}', space=vmem, size = 0x12000, scoped, tag = 'internal scratch']
  %s0 = inlined_call_operand.vmem [shape: bf16[16,128], index: 0, kind: input, shape index: {}]
  %s1 = inlined_call_operand.vmem [shape: bf16[128,128], index: 1, kind: input, shape index: {}]
  %s2 = inlined_call_operand.vmem [shape: f32[1,128], index: 2, kind: input, shape index: {}]
  %s3 = inlined_call_operand.vmem [shape: f32[16,128], index: 3, kind: output, shape index: {0}]
  %s4 = inlined_call_operand.vmem [shape: f32[1,8,128], index: 4, kind: output, shape index: {1}]
  %s5 = inlined_call_operand.vmem [shape: f32[1,8,128], index: 5, kind: output, shape index: {2}]
  %6 = xla_tuple %s3, %s4, %s5
  %s7 = sld [smem:[#allocation0]]
  $region38: #{daen_forward.2} parent=0
    _
  %s9 = ssub.s32 1, %s7
  %s10 = scalar_select 0, %s9, %s7
  // Predicated region
  $region2: #{daen_forward.2} parent=0 // pred_check
    _
  $region3: #{daen_forward.2} parent=0 // pred_check_branch
    %12 = sbr.rel (0) target = $region5
  $region4: #{daen_forward.2} parent=0 // pred_region
    _
  $region5: #{daen_forward.2} parent=0 // pred_fallthru
    _
  // Predicated region
  $region6: #{daen_forward.2} parent=0 // pred_check
    _
  $region7: #{daen_forward.2} parent=0 // pred_check_branch
    %14 = sbr.rel (0) target = $region9
  $region8: #{daen_forward.2} parent=0 // pred_region
    _
  $region9: #{daen_forward.2} parent=0 // pred_fallthru
    _
  // Predicated region
  $region10: #{daen_forward.2} parent=0 // pred_check
    _
  $region11: #{daen_forward.2} parent=0 // pred_check_branch
    %16 = sbr.rel (0) target = $region13
  $region12: #{daen_forward.2} parent=0 // pred_region
    _
  $region13: #{daen_forward.2} parent=0 // pred_fallthru
    _
  %v18 = vld [vmem:[%s0] sm:$0xf]
  %v19 = vld [vmem:[%s0 + $0x4] sm:$0xf]
  %v20 = vld [vmem:[%s1] sm:$0xf]
  %v21 = vld [vmem:[%s1 + $0x4] sm:$0xf]
  %v22 = vld [vmem:[%s1 + $0x8] sm:$0xf]
  %v23 = vld [vmem:[%s1 + $0xc] sm:$0xf]
  %v24 = vld [vmem:[%s1 + $0x10] sm:$0xf]
  %v25 = vld [vmem:[%s1 + $0x14] sm:$0xf]
  %v26 = vld [vmem:[%s1 + $0x18] sm:$0xf]
  %v27 = vld [vmem:[%s1 + $0x1c] sm:$0xf]
  %v28 = vld [vmem:[%s1 + $0x20] sm:$0xf]
  %v29 = vld [vmem:[%s1 + $0x24] sm:$0xf]
  %v30 = vld [vmem:[%s1 + $0x28] sm:$0xf]
  %v31 = vld [vmem:[%s1 + $0x2c] sm:$0xf]
  %v32 = vld [vmem:[%s1 + $0x30] sm:$0xf]
  %v33 = vld [vmem:[%s1 + $0x34] sm:$0xf]
  %v34 = vld [vmem:[%s1 + $0x38] sm:$0xf]
  %v35 = vld [vmem:[%s1 + $0x3c] sm:$0xf]
  %v36 = vld [vmem:[%s2] sm:$0x1]
  %v38 = vlaneseq
  %v39 = vshrl.u32 %v38, 7
  %v40 = vsub.s32 0, %v39
  %v41 = vrot.slane %v36, %v40
  %v45 = vunpack.c.l.b16 %v18
  %v46 = vunpack.c.l.b16 %v19
  %v47 = vpack.c.b16 %v46, %v45
  %v65 = vunpack.c.l.b16 %v20
  %v66 = vunpack.c.l.b16 %v21
  %v67 = vunpack.c.l.b16 %v22
  %v68 = vunpack.c.l.b16 %v23
  %v69 = vunpack.c.l.b16 %v24
  %v70 = vunpack.c.l.b16 %v25
  %v71 = vunpack.c.l.b16 %v26
  %v72 = vunpack.c.l.b16 %v27
  %v73 = vunpack.c.l.b16 %v28
  %v74 = vunpack.c.l.b16 %v29
  %v75 = vunpack.c.l.b16 %v30
  %v76 = vunpack.c.l.b16 %v31
  %v77 = vunpack.c.l.b16 %v32
  %v78 = vunpack.c.l.b16 %v33
  %v79 = vunpack.c.l.b16 %v34
  %v80 = vunpack.c.l.b16 %v35
  %v81 = vpack.c.b16 %v66, %v65
  %v82 = vpack.c.b16 %v68, %v67
  %v83 = vpack.c.b16 %v70, %v69
  %v84 = vpack.c.b16 %v72, %v71
  %v85 = vpack.c.b16 %v74, %v73
  %v86 = vpack.c.b16 %v76, %v75
  %v87 = vpack.c.b16 %v78, %v77
  %v88 = vpack.c.b16 %v80, %v79
  %97 = vmatprep.subr.bf16.mxu0 0
  %98 = vmatpush1.bf16.msra.mxu0 %v88
  %99 = vmatprep.subr.bf16.mxu0 0
  %100 = vmatpush1.bf16.msra.mxu0 %v87
  %101 = vmatprep.subr.bf16.mxu0 0
  %102 = vmatpush1.bf16.msra.mxu0 %v86
  %103 = vmatprep.subr.bf16.mxu0 0
  %104 = vmatpush1.bf16.msra.mxu0 %v85
  %105 = vmatprep.subr.bf16.mxu0 0
  %106 = vmatpush1.bf16.msra.mxu0 %v84
  %107 = vmatprep.subr.bf16.mxu0 0
  %108 = vmatpush1.bf16.msra.mxu0 %v83
  %109 = vmatprep.subr.bf16.mxu0 0
  %110 = vmatpush1.bf16.msra.mxu0 %v82
  %111 = vmatprep.subr.bf16.mxu0 0
  %112 = vmatpush1.bf16.msra.mxu0 %v81
  %113 = vmatprep.subr.bf16.mxu0 0
  %114 = vmatpush2.bf16.msra.mxu0 0
  %115 = vmatprep.subr.bf16.mxu0 0
  %116 = vmatpush2.bf16.msra.mxu0 0
  %117 = vmatprep.subr.bf16.mxu0 0
  %118 = vmatpush2.bf16.msra.mxu0 0
  %119 = vmatprep.subr.bf16.mxu0 0
  %120 = vmatpush2.bf16.msra.mxu0 0
  %121 = vmatprep.subr.bf16.mxu0 0
  %122 = vmatpush2.bf16.msra.mxu0 0
  %123 = vmatprep.subr.bf16.mxu0 0
  %124 = vmatpush2.bf16.msra.mxu0 0
  %125 = vmatprep.subr.bf16.mxu0 0
  %126 = vmatpush2.bf16.msra.mxu0 0
  %127 = vmatprep.subr.bf16.mxu0 0
  %128 = vmatpush2.bf16.msra.mxu0 0
  %129 = vmatprep.mubr.bf16.mxu0 0
  %130 = vmatmul.mubr.bf16.gmra.mxu0 %v47
  %v131 = vpop.f32.mrf.mxu0
  %v132 = vadd.f32 %v41, %v131
  %v133 = vpop.f32.mrf.mxu0
  %v134 = vpop.f32.mrf.mxu0
  %v135 = vadd.f32 %v41, %v134
  %v136 = vpop.f32.mrf.mxu0
  %137 = vdwg.mxu0
  %138 = vst [vmem:[%s3] sm:$0xff] %v132
  %139 = vst [vmem:[%s3 + $0x8] sm:$0xff] %v135
  %v140 = vadd.f32 %v132, %v135
  %v141 = vrot.slane %v140, 4
  %v142 = vadd.f32 %v140, %v141
  %v143 = vrot.slane %v142, 2
  %v144 = vadd.f32 %v142, %v143
  %v145 = vrot.slane %v144, 1
  %v146 = vadd.f32 %v144, %v145
  %v147 = vmul.f32 %v132, %v132
  %v148 = vmul.f32 %v135, %v135
  %v149 = vadd.f32 %v147, %v148
  %v150 = vrot.slane %v149, 4
  %v151 = vadd.f32 %v149, %v150
  %v152 = vrot.slane %v151, 2
  %v153 = vadd.f32 %v151, %v152
  %v154 = vrot.slane %v153, 1
  %v155 = vadd.f32 %v153, %v154
  %156 = vst [vmem:[%s4] sm:$0xff] %v146
  %157 = vst [vmem:[%s5] sm:$0xff] %v155
  // Predicated region
  $region14: #{daen_forward.2} parent=0 // pred_check
    _
  $region15: #{daen_forward.2} parent=0 // pred_check_branch
    %159 = sbr.rel (0) target = $region17
  $region16: #{daen_forward.2} parent=0 // pred_region
    _
  $region17: #{daen_forward.2} parent=0 // pred_fallthru
    _
  // Predicated region
  $region18: #{daen_forward.2} parent=0 // pred_check
    _
  $region19: #{daen_forward.2} parent=0 // pred_check_branch
    %161 = sbr.rel (0) target = $region21
  $region20: #{daen_forward.2} parent=0 // pred_region
    _
  $region21: #{daen_forward.2} parent=0 // pred_fallthru
    _
  // Predicated region
  $region22: #{daen_forward.2} parent=0 // pred_check
    _
  $region23: #{daen_forward.2} parent=0 // pred_check_branch
    %163 = sbr.rel (0) target = $region25
  $region24: #{daen_forward.2} parent=0 // pred_region
    _
  $region25: #{daen_forward.2} parent=0 // pred_fallthru
    _
  // Predicated region
  $region26: #{daen_forward.2} parent=0 // pred_check
    _
  $region27: #{daen_forward.2} parent=0 // pred_check_branch
    %165 = sbr.rel (0) target = $region29
  $region28: #{daen_forward.2} parent=0 // pred_region
    _
  $region29: #{daen_forward.2} parent=0 // pred_fallthru
    _
  // Predicated region
  $region30: #{daen_forward.2} parent=0 // pred_check
    _
  $region31: #{daen_forward.2} parent=0 // pred_check_branch
    %167 = sbr.rel (0) target = $region33
  $region32: #{daen_forward.2} parent=0 // pred_region
    _
  $region33: #{daen_forward.2} parent=0 // pred_fallthru
    _
  // Predicated region
  $region34: #{daen_forward.2} parent=0 // pred_check
    _
  $region35: #{daen_forward.2} parent=0 // pred_check_branch
    %169 = sbr.rel (0) target = $region37
  $region36: #{daen_forward.2} parent=0 // pred_region
    _
  $region37: #{daen_forward.2} parent=0 // pred_fallthru
    _

// kernel: daen_forward.3
$region0: #{daen_forward.3}
  #allocation0 [shape = 'u32[]', space=smem, size = 0x4, offset = 0x4, fixed_abs, tag = 'smem constant byte address 0x4 - core index']
  #allocation1 [shape = 'u32[144,128]{1,0:T(1,128)}', space=vmem, size = 0x12000, scoped, tag = 'internal scratch']
  %s0 = inlined_call_operand.vmem [shape: f32[16,128], index: 0, kind: input, shape index: {}]
  %s1 = inlined_call_operand.vmem [shape: f32[1,128], index: 1, kind: input, shape index: {}]
  %s2 = inlined_call_operand.vmem [shape: f32[1,128], index: 2, kind: input, shape index: {}]
  %s3 = inlined_call_operand.vmem [shape: bf16[128,128], index: 3, kind: input, shape index: {}]
  %s4 = inlined_call_operand.vmem [shape: f32[16,128], index: 4, kind: output, shape index: {0}]
  %s5 = inlined_call_operand.hbm [shape: f32[16,128], index: 5, kind: output, shape index: {1}]
  %6 = xla_tuple %s4, %s5
  %s7 = sld [smem:[#allocation0]]
  $region34: #{daen_forward.3} parent=0
    _
  %s9 = ssub.s32 1, %s7
  %s10 = scalar_select 0, %s9, %s7
  $region1: #{daen_forward.3} parent=0
    #allocation2 [shape = 'u8[8192]{0}', space=vmem, size = 0x2000, scoped, tag = 'output window, operand 1, single buffered']
    #allocation3 [shape = 's32[1]{0}', space=sflag, size = 0x4, scoped, tag = 'scoped memory for daen_forward.3']
    %11 = vsyncpa [#allocation3], 0
    // Predicated region
    $region2: #{daen_forward.3} parent=1 // pred_check
      _
    $region3: #{daen_forward.3} parent=1 // pred_check_branch
      %13 = sbr.rel (0) target = $region5
    $region4: #{daen_forward.3} parent=1 // pred_region
      _
    $region5: #{daen_forward.3} parent=1 // pred_fallthru
      _
    // Predicated region
    $region6: #{daen_forward.3} parent=1 // pred_check
      _
    $region7: #{daen_forward.3} parent=1 // pred_check_branch
      %15 = sbr.rel (0) target = $region9
    $region8: #{daen_forward.3} parent=1 // pred_region
      _
    $region9: #{daen_forward.3} parent=1 // pred_fallthru
      _
    // Predicated region
    $region10: #{daen_forward.3} parent=1 // pred_check
      _
    $region11: #{daen_forward.3} parent=1 // pred_check_branch
      %17 = sbr.rel (0) target = $region13
    $region12: #{daen_forward.3} parent=1 // pred_region
      _
    $region13: #{daen_forward.3} parent=1 // pred_fallthru
      _
    // Predicated region
    $region14: #{daen_forward.3} parent=1 // pred_check
      _
    $region15: #{daen_forward.3} parent=1 // pred_check_branch
      %19 = sbr.rel (0) target = $region17
    $region16: #{daen_forward.3} parent=1 // pred_region
      _
    $region17: #{daen_forward.3} parent=1 // pred_fallthru
      _
    %v21 = vld [vmem:[%s0] sm:$0xff]
    %v22 = vld [vmem:[%s0 + $0x8] sm:$0xff]
    %v23 = vld [vmem:[%s1] sm:$0x1]
    %v25 = vlaneseq
    %v26 = vshrl.u32 %v25, 7
    %v27 = vsub.s32 0, %v26
    %v28 = vrot.slane %v23, %v27
    %v30 = vmul.f32 %v21, %v28
    %v31 = vmul.f32 %v22, %v28
    %v32 = vld [vmem:[%s2] sm:$0x1]
    %v34 = vlaneseq
    %v35 = vshrl.u32 %v34, 7
    %v36 = vsub.s32 0, %v35
    %v37 = vrot.slane %v32, %v36
    %v39 = vadd.f32 %v30, %v37
    %v40 = vadd.f32 %v31, %v37
    %vm41 = vcmp.ge.f32.partialorder %v39, 0.0
    %vm42 = vcmp.ge.f32.partialorder %v40, 0.0
    %v43 = vmul.f32 %v39, 0.01
    %v44 = vmul.f32 %v40, 0.01
    %v45 = vsel %vm41, %v39, %v43
    %v46 = vsel %vm42, %v40, %v44
    %47 = vadd.xlane.f32.xlu0 %v45
    %v48 = vpop.xlane.xlu0 %47
    %49 = vadd.xlane.f32.xlu0 %v46
    %v50 = vpop.xlane.xlu0 %49
    %v51 = vrcp.pop %v48
    %v52 = vrcp.pop %v50
    %v53 = vmul.f32 %v45, %v51
    %v54 = vmul.f32 %v46, %v52
    %55 = vst [vmem:[%s4] sm:$0xff] %v53
    %56 = vst [vmem:[%s4 + $0x8] sm:$0xff] %v54
    %v57 = vpack.c.bf16 %v54, %v53
    %v58 = vld [vmem:[%s3] sm:$0xf]
    %v59 = vld [vmem:[%s3 + $0x4] sm:$0xf]
    %v60 = vld [vmem:[%s3 + $0x8] sm:$0xf]
    %v61 = vld [vmem:[%s3 + $0xc] sm:$0xf]
    %v62 = vld [vmem:[%s3 + $0x10] sm:$0xf]
    %v63 = vld [vmem:[%s3 + $0x14] sm:$0xf]
    %v64 = vld [vmem:[%s3 + $0x18] sm:$0xf]
    %v65 = vld [vmem:[%s3 + $0x1c] sm:$0xf]
    %v66 = vld [vmem:[%s3 + $0x20] sm:$0xf]
    %v67 = vld [vmem:[%s3 + $0x24] sm:$0xf]
    %v68 = vld [vmem:[%s3 + $0x28] sm:$0xf]
    %v69 = vld [vmem:[%s3 + $0x2c] sm:$0xf]
    %v70 = vld [vmem:[%s3 + $0x30] sm:$0xf]
    %v71 = vld [vmem:[%s3 + $0x34] sm:$0xf]
    %v72 = vld [vmem:[%s3 + $0x38] sm:$0xf]
    %v73 = vld [vmem:[%s3 + $0x3c] sm:$0xf]
    %v90 = vunpack.c.l.b16 %v58
    %v91 = vunpack.c.l.b16 %v59
    %v92 = vunpack.c.l.b16 %v60
    %v93 = vunpack.c.l.b16 %v61
    %v94 = vunpack.c.l.b16 %v62
    %v95 = vunpack.c.l.b16 %v63
    %v96 = vunpack.c.l.b16 %v64
    %v97 = vunpack.c.l.b16 %v65
    %v98 = vunpack.c.l.b16 %v66
    %v99 = vunpack.c.l.b16 %v67
    %v100 = vunpack.c.l.b16 %v68
    %v101 = vunpack.c.l.b16 %v69
    %v102 = vunpack.c.l.b16 %v70
    %v103 = vunpack.c.l.b16 %v71
    %v104 = vunpack.c.l.b16 %v72
    %v105 = vunpack.c.l.b16 %v73
    %v106 = vpack.c.b16 %v91, %v90
    %v107 = vpack.c.b16 %v93, %v92
    %v108 = vpack.c.b16 %v95, %v94
    %v109 = vpack.c.b16 %v97, %v96
    %v110 = vpack.c.b16 %v99, %v98
    %v111 = vpack.c.b16 %v101, %v100
    %v112 = vpack.c.b16 %v103, %v102
    %v113 = vpack.c.b16 %v105, %v104
    %122 = vmatprep.subr.bf16.mxu0 0
    %123 = vmatpush1.bf16.msra.mxu0 %v113
    %124 = vmatprep.subr.bf16.mxu0 0
    %125 = vmatpush1.bf16.msra.mxu0 %v112
    %126 = vmatprep.subr.bf16.mxu0 0
    %127 = vmatpush1.bf16.msra.mxu0 %v111
    %128 = vmatprep.subr.bf16.mxu0 0
    %129 = vmatpush1.bf16.msra.mxu0 %v110
    %130 = vmatprep.subr.bf16.mxu0 0
    %131 = vmatpush1.bf16.msra.mxu0 %v109
    %132 = vmatprep.subr.bf16.mxu0 0
    %133 = vmatpush1.bf16.msra.mxu0 %v108
    %134 = vmatprep.subr.bf16.mxu0 0
    %135 = vmatpush1.bf16.msra.mxu0 %v107
    %136 = vmatprep.subr.bf16.mxu0 0
    %137 = vmatpush1.bf16.msra.mxu0 %v106
    %138 = vmatprep.subr.bf16.mxu0 0
    %139 = vmatpush2.bf16.msra.mxu0 0
    %140 = vmatprep.subr.bf16.mxu0 0
    %141 = vmatpush2.bf16.msra.mxu0 0
    %142 = vmatprep.subr.bf16.mxu0 0
    %143 = vmatpush2.bf16.msra.mxu0 0
    %144 = vmatprep.subr.bf16.mxu0 0
    %145 = vmatpush2.bf16.msra.mxu0 0
    %146 = vmatprep.subr.bf16.mxu0 0
    %147 = vmatpush2.bf16.msra.mxu0 0
    %148 = vmatprep.subr.bf16.mxu0 0
    %149 = vmatpush2.bf16.msra.mxu0 0
    %150 = vmatprep.subr.bf16.mxu0 0
    %151 = vmatpush2.bf16.msra.mxu0 0
    %152 = vmatprep.subr.bf16.mxu0 0
    %153 = vmatpush2.bf16.msra.mxu0 0
    %154 = vmatprep.mubr.bf16.mxu0 0
    %155 = vmatmul.mubr.bf16.gmra.mxu0 %v57
    %v156 = vpop.f32.mrf.mxu0
    %v157 = vadd.f32 0.0, %v156
    %v158 = vpop.f32.mrf.mxu0
    %v159 = vpop.f32.mrf.mxu0
    %v160 = vadd.f32 0.0, %v159
    %v161 = vpop.f32.mrf.mxu0
    %162 = vdwg.mxu0
    %163 = vst [vmem:[#allocation2] sm:$0xff] %v157
    %164 = vst [vmem:[#allocation2 + $0x8] sm:$0xff] %v160
    // Predicated region
    $region18: #{daen_forward.3} parent=1 // pred_check
      _
    $region19: #{daen_forward.3} parent=1 // pred_check_branch
      %166 = sbr.rel (0) target = $region21
    $region20: #{daen_forward.3} parent=1 // pred_region
      _
    $region21: #{daen_forward.3} parent=1 // pred_fallthru
      _
    // Predicated region
    $region22: #{daen_forward.3} parent=1 // pred_check
      _
    $region23: #{daen_forward.3} parent=1 // pred_check_branch
      %168 = sbr.rel (0) target = $region25
    $region24: #{daen_forward.3} parent=1 // pred_region
      %s170 = ssub.s32 256, 256
      %171 = vsyncadd [#allocation3], %s170
      %s172 = sshll.u32 [#allocation2], 4
      %s173 = int_to_ptr.vmem [resolvable:$true] %s172
      %178 = dma.vmem_to_hbm [thread:$0]  %s173, 256, %s5, [#allocation3], 128, 128, 8
    $region25: #{daen_forward.3} parent=1 // pred_fallthru
      _
    // Predicated region
    $region26: #{daen_forward.3} parent=1 // pred_check
      _
    $region27: #{daen_forward.3} parent=1 // pred_check_branch
      %180 = sbr.rel (0) target = $region29
    $region28: #{daen_forward.3} parent=1 // pred_region
      _
    $region29: #{daen_forward.3} parent=1 // pred_fallthru
      _
    // Predicated region
    $region30: #{daen_forward.3} parent=1 // pred_check
      _
    $region31: #{daen_forward.3} parent=1 // pred_check_branch
      %182 = sbr.rel (0) target = $region33
    $region32: #{daen_forward.3} parent=1 // pred_region
      %183 = dma.done [#allocation3], 256
    $region33: #{daen_forward.3} parent=1 // pred_fallthru
      _
    %184 = vsyncpa [#allocation3], 1

</llo_original>
